<compile_context>
chip_gen: v7x
topology: tpu7x:2x2x1
jax: 0.10.0
libtpu: 0.0.40
codegen_flags: <defaults>
</compile_context>

<pallas_src>
import functools

import jax
import jax.numpy as jnp
from jax import lax
from jax.experimental import pallas as pl
from jax.experimental.pallas import tpu as pltpu


def _cdiv(a: int, b: int) -> int:
    return -(-a // b)


def _ceil_to(a: int, b: int) -> int:
    return _cdiv(a, b) * b


@functools.lru_cache(maxsize=None)
def _vmem_capacity_bytes() -> int:
    try:
        return int(pltpu.get_tpu_info().vmem_capacity_bytes)
    except Exception:
        return 64 * 1024 * 1024          # conservative (v7x-sized) fallback


@functools.lru_cache(maxsize=None)
def _has_bf16_valu() -> bool:
    """v6e / v7x have a bf16 VALU; v5e and older do not."""
    try:
        kind = jax.devices()[0].device_kind.lower()
    except Exception:
        return True
    return not any(v in kind for v in ("v2", "v3", "v4", "v5"))


@functools.lru_cache(maxsize=None)
def _single_buffer_supported() -> bool:
    """Does this JAX accept pipeline_mode=pl.Buffered(1) on BlockSpec?"""
    try:
        pl.BlockSpec((8, 128), lambda i: (0, 0), pipeline_mode=pl.Buffered(1))
        return True
    except (TypeError, AttributeError):
        return False


def _const_spec(shape):
    """BlockSpec for a grid-invariant operand; single-buffered when supported."""
    index_map = lambda n, p: (0,) * len(shape)
    if _single_buffer_supported():
        return pl.BlockSpec(shape, index_map, pipeline_mode=pl.Buffered(1))
    return pl.BlockSpec(shape, index_map)


def _vmem_need_bytes(t, C, itemsize, act_itemsize, h_rows, w_bufs, w_bytes):
    io = 4 * t * C * itemsize                                  # 2x dbl-buffered in+out
    interm = h_rows * t * (4 + act_itemsize + itemsize) + 2 * C * t * 4
    return io + w_bufs * w_bytes + interm


def _pick_spatial_tile(HW, N, need, usable_vmem, tile_hw):
    """Pick the spatial tile (lane) width: multiple of 128 (or full extent)."""
    if HW <= 128:
        return HW                                              # single full-extent tile
    budget = int(usable_vmem * 0.85)
    t_cap, t_try = 128, 256
    while t_try <= tile_hw and need(t_try) <= budget:
        t_cap, t_try = t_try, t_try + 128
    # Keep both v7x TensorCores busy when there is only one image.
    force_split = (N == 1 and HW >= 256)
    if force_split:
        t_cap = min(t_cap, _ceil_to(_cdiv(HW, 2), 128))
    cands = list(range(128, min(t_cap, HW) + 1, 128))
    if HW <= t_cap and not force_split:
        cands.append(HW)                                       # single full-extent tile
    best_t, best_score = 128, -1.0
    for cand in cands:
        util = HW / float(_cdiv(HW, cand) * cand)              # non-padded-lane fraction
        score = util + 0.05 * min(cand, 1024) / 1024.0         # mild large-tile bonus
        if score > best_score + 1e-9:
            best_t, best_score = cand, score
    return best_t


def _ff_kernel(x_ref, w1_ref, shift_ref, w2_ref, b2_ref, o_ref, *,
               act_dtype, hidden_chunk):
    # x_ref:     (1, C, T)      spatial positions on lanes (input dtype)
    # w1_ref:    (hidden, C)    conv1 weight with BN scale folded (input dtype)
    # shift_ref: (hidden, 1)    folded BN shift (f32)
    # w2_ref:    (C, hidden)    conv2 weight with the hardswish 1/6 folded (input dtype)
    # b2_ref:    (C, 1)         conv2 bias (f32)
    # o_ref:     (1, C, T)
    x = x_ref[0]                                               # (C, T)
    hidden = w1_ref.shape[0]

    def act_block(w1_blk, shift_blk):
        # Conv1 (1x1, BN scale folded) -> f32 MXU accumulate, then hardswish*6
        # (the 1/6 is folded into w2).  Epilogue runs in act_dtype.
        h = jnp.dot(w1_blk, x, preferred_element_type=jnp.float32)
        h = (h + shift_blk).astype(act_dtype)
        return h * jnp.clip(h + 3.0, 0.0, 6.0)

    if hidden_chunk >= hidden:
        h = act_block(w1_ref[...], shift_ref[...])
        acc = jnp.dot(w2_ref[...], h.astype(x.dtype),
                      preferred_element_type=jnp.float32)
    else:
        # Chunk over hidden: bounds the live f32 intermediate to chunk*T
        # and interleaves MXU and VPU work (hidden is divisible by chunk).
        def body(i, acc):
            k0 = pl.multiple_of(i * hidden_chunk, hidden_chunk)
            h = act_block(w1_ref[pl.ds(k0, hidden_chunk), :],
                          shift_ref[pl.ds(k0, hidden_chunk), :])
            return acc + jnp.dot(w2_ref[:, pl.ds(k0, hidden_chunk)],
                                 h.astype(x.dtype),
                                 preferred_element_type=jnp.float32)
        acc = lax.fori_loop(0, hidden // hidden_chunk, body,
                            jnp.zeros(o_ref.shape[1:], jnp.float32))

    o_ref[0] = (acc + b2_ref[...]).astype(o_ref.dtype)


@functools.partial(jax.jit, static_argnames=("tile_hw",))
def feed_forward(x_nchw, w1, gamma, beta, run_mean, run_var, w2, b2, *,
                 eps=1e-5, tile_hw=2048):
    """Fused FeedForward forward pass (eval-mode BN, dropout=0).

    x_nchw: (N, dim, H, W); bf16 recommended for perf.
    w1: (hidden, dim) == conv1.weight[:, :, 0, 0]
    w2: (dim, hidden) == conv2.weight[:, :, 0, 0];  b2: (dim,) == conv2.bias
    gamma/beta/run_mean/run_var: (hidden,) BatchNorm2d params / running stats.
    """
    N, C, H, W = x_nchw.shape
    hidden = w1.shape[0]
    HW = H * W
    op_dtype = x_nchw.dtype
    itemsize = jnp.dtype(op_dtype).itemsize

    # Hardswish epilogue dtype: bf16 where the chip has a bf16 VALU (v6e/v7x),
    # f32 otherwise (v5e) or when the inputs are f32.
    act_dtype = (jnp.bfloat16
                 if (op_dtype == jnp.bfloat16 and _has_bf16_valu())
                 else jnp.float32)
    act_itemsize = jnp.dtype(act_dtype).itemsize

    # ---- Fold BN (eval) into conv1 weight; fold hardswish 1/6 into conv2 ----
    scale = gamma / jnp.sqrt(run_var + eps)                    # (hidden,)
    w1_s = (w1.astype(jnp.float32) * scale[:, None]).astype(op_dtype)
    shift = (beta - run_mean * scale).reshape(hidden, 1).astype(jnp.float32)
    w2_c = (w2.astype(jnp.float32) * (1.0 / 6.0)).astype(op_dtype)
    b2_c = b2.reshape(C, 1).astype(jnp.float32)

    # ---- hidden chunking (only for large hidden) ----
    hidden_chunk = 512
    if not (hidden >= 2048 and hidden % hidden_chunk == 0):
        hidden_chunk = hidden
    h_rows = min(hidden, hidden_chunk)

    # ---- per-chip VMEM budget -> spatial tile ----
    vmem_cap = _vmem_capacity_bytes()
    usable = max(min(vmem_cap - (16 << 20), int(vmem_cap * 0.85)), 24 << 20)
    w_bytes = 2 * hidden * C * itemsize + (hidden + C) * 4
    w_bufs = 1 if _single_buffer_supported() else 2
    need = lambda t: _vmem_need_bytes(t, C, itemsize, act_itemsize,
                                      h_rows, w_bufs, w_bytes)
    t = _pick_spatial_tile(HW, N, need, usable, int(tile_hw))
    n_sp = _cdiv(HW, t)
    grid = (N, n_sp)
    vmem_limit = int(min(usable, max(2 * need(t), 32 << 20)))

    cost = pl.CostEstimate(
        flops=4 * N * n_sp * t * C * hidden,                   # two matmuls, 2 flop/MAC
        transcendentals=0,
        bytes_accessed=2 * N * C * HW * itemsize + w_bytes,
    )

    kernel = functools.partial(_ff_kernel, act_dtype=act_dtype,
                               hidden_chunk=hidden_chunk)

    x3 = x_nchw.reshape(N, C, HW)                              # metadata-only reshape
    out3 = pl.pallas_call(
        kernel,
        out_shape=jax.ShapeDtypeStruct((N, C, HW), op_dtype),  # no pad, no post-slice
        grid_spec=pltpu.PrefetchScalarGridSpec(
            num_scalar_prefetch=0,
            grid=grid,
            in_specs=[
                pl.BlockSpec((1, C, t), lambda n, p: (n, 0, p)),   # x tile
                _const_spec((hidden, C)),                          # w1 (BN-scaled)
                _const_spec((hidden, 1)),                          # BN shift
                _const_spec((C, hidden)),                          # w2 (/6 folded)
                _const_spec((C, 1)),                               # b2
            ],
            out_specs=pl.BlockSpec((1, C, t), lambda n, p: (n, 0, p)),
        ),
        compiler_params=pltpu.CompilerParams(
            dimension_semantics=("parallel", "parallel"),
            vmem_limit_bytes=vmem_limit,
        ),
        cost_estimate=cost,
    )(x3, w1_s, shift, w2_c, b2_c)

    return out3.reshape(N, C, H, W)


if __name__ == "__main__":
    def reference(x, w1, gamma, beta, rm, rv, w2, b2, eps=1e-5):
        N, C, H, W = x.shape
        xf = x.reshape(N, C, H * W).astype(jnp.float32)
        h = jnp.einsum("oc,ncp->nop", w1.astype(jnp.float32), xf)
        h = (h - rm[None, :, None]) / jnp.sqrt(rv + eps)[None, :, None]
        h = h * gamma[None, :, None] + beta[None, :, None]
        h = h * jnp.clip(h + 3.0, 0.0, 6.0) / 6.0
        o = jnp.einsum("co,nop->ncp", w2.astype(jnp.float32), h) + b2[None, :, None]
        return o.reshape(N, C, H, W)

    def make_case(key, N, dim, mult, H, W):
        hidden = dim * mult
        ks = jax.random.split(key, 8)
        x = jax.random.normal(ks[0], (N, dim, H, W), dtype=jnp.float32)
        # PyTorch layouts: conv1.weight (hidden,dim,1,1) -> (hidden,dim);
        #                  conv2.weight (dim,hidden,1,1) -> (dim,hidden).
        w1 = jax.random.normal(ks[1], (hidden, dim), dtype=jnp.float32) * 0.2
        w2 = jax.random.normal(ks[2], (dim, hidden), dtype=jnp.float32) * 0.2
        b2 = jax.random.normal(ks[3], (dim,), dtype=jnp.float32) * 0.1
        gamma = 1.0 + 0.1 * jax.random.normal(ks[4], (hidden,), dtype=jnp.float32)
        beta = 0.1 * jax.random.normal(ks[5], (hidden,), dtype=jnp.float32)
        rm = 0.1 * jax.random.normal(ks[6], (hidden,), dtype=jnp.float32)
        rv = jnp.abs(jax.random.normal(ks[7], (hidden,), dtype=jnp.float32)) + 0.5
        return (x, w1, gamma, beta, rm, rv, w2, b2)

    key = jax.random.PRNGKey(0)
    k1, k2, k3 = jax.random.split(key, 3)

    # Case 1: dim=4, mult=4, batch=2, 16x16 (HW=256 -> one lane-dense tile).
    args = make_case(k1, 2, 4, 4, 16, 16)
    ref = reference(*args)
    out = jax.block_until_ready(feed_forward(*args))
    assert out.shape == (2, 4, 16, 16)
    assert jnp.allclose(out, ref, atol=1e-4, rtol=1e-4), "f32 mismatch vs reference"

    # bf16 fast path (bf16 MXU operands, f32 accumulation): loose check.
    out_bf16 = jax.block_until_ready(
        feed_forward(args[0].astype(jnp.bfloat16), *args[1:]))
    assert out_bf16.dtype == jnp.bfloat16
    assert jnp.allclose(out_bf16.astype(jnp.float32), ref, atol=1e-1, rtol=1e-1), \
        "bf16 mismatch vs reference"

    # Case 2: N=1, 20x20 (HW=400): non-divisible grid with a masked edge tile
    # and the >=2-spatial-tiles rule (keeps both v7x TensorCores busy).
    args2 = make_case(k2, 1, 4, 4, 20, 20)
    out2 = jax.block_until_ready(feed_forward(*args2))
    assert jnp.allclose(out2, reference(*args2), atol=1e-4, rtol=1e-4), \
        "masked-edge case mismatch vs reference"

    # Case 3: 6x6 (HW=36 < 128) -> single full-extent spatial block.
    args3 = make_case(k3, 2, 4, 4, 6, 6)
    out3 = jax.block_until_ready(feed_forward(*args3))
    assert jnp.allclose(out3, reference(*args3), atol=1e-4, rtol=1e-4), \
        "small-spatial case mismatch vs reference"

    print("KERNEL_OK")
</pallas_src>

<mosaic_0001>
module attributes {stable_mosaic.version = 11 : i64} {
  func.func @_ff_kernel(%arg0: i32, %arg1: i32, %arg2: memref<1x4x256xf32, #tpu.memory_space<vmem>>, %arg3: memref<16x4xf32, #tpu.memory_space<vmem>>, %arg4: memref<16x1xf32, #tpu.memory_space<vmem>>, %arg5: memref<4x16xf32, #tpu.memory_space<vmem>>, %arg6: memref<4x1xf32, #tpu.memory_space<vmem>>, %arg7: memref<1x4x256xf32, #tpu.memory_space<vmem>>) attributes {dimension_semantics = [#tpu.dimension_semantics<parallel>, #tpu.dimension_semantics<parallel>], iteration_bounds = array<i64: 2, 1>, scalar_prefetch = 0 : i64, scratch_operands = 0 : i64, tpu.core_type = #tpu.core_type<tc>, window_params = [{transform_indices = @transform_0, window_bounds = array<i64: 1, 4, 256>}, {pipeline_mode = #tpu.pipeline_mode<synchronous>, transform_indices = @transform_1, window_bounds = array<i64: 16, 4>}, {pipeline_mode = #tpu.pipeline_mode<synchronous>, transform_indices = @transform_2, window_bounds = array<i64: 16, 1>}, {pipeline_mode = #tpu.pipeline_mode<synchronous>, transform_indices = @transform_3, window_bounds = array<i64: 4, 16>}, {pipeline_mode = #tpu.pipeline_mode<synchronous>, transform_indices = @transform_4, window_bounds = array<i64: 4, 1>}, {transform_indices = @transform_5, window_bounds = array<i64: 1, 4, 256>}]} {
    %c0 = arith.constant 0 : index
    %c0_0 = arith.constant 0 : index
    %c0_1 = arith.constant 0 : index
    %0 = vector.load %arg2[%c0, %c0_0, %c0_1] : memref<1x4x256xf32, #tpu.memory_space<vmem>>, vector<1x4x256xf32>
    %1 = vector.shape_cast %0 : vector<1x4x256xf32> to vector<4x256xf32>
    %c0_2 = arith.constant 0 : index
    %c0_3 = arith.constant 0 : index
    %2 = vector.load %arg3[%c0_2, %c0_3] : memref<16x4xf32, #tpu.memory_space<vmem>>, vector<16x4xf32>
    %c0_4 = arith.constant 0 : index
    %c0_5 = arith.constant 0 : index
    %3 = vector.load %arg4[%c0_4, %c0_5] : memref<16x1xf32, #tpu.memory_space<vmem>>, vector<16x1xf32>
    %cst = arith.constant dense<0.000000e+00> : vector<16x256xf32>
    %4 = tpu.matmul %2, %1, %cst {dimension_numbers = #tpu.dot_dimension_numbers<[1], [0], [0], [1], [0, 0, 1, 1], [], []>} : vector<16x4xf32>, vector<4x256xf32>, vector<16x256xf32> -> vector<16x256xf32>
    %5 = vector.broadcast %3 : vector<16x1xf32> to vector<16x256xf32>
    %6 = arith.addf %4, %5 : vector<16x256xf32>
    %cst_6 = arith.constant 3.000000e+00 : f32
    %7 = vector.broadcast %cst_6 : f32 to vector<16x256xf32>
    %8 = arith.addf %6, %7 : vector<16x256xf32>
    %cst_7 = arith.constant 0.000000e+00 : f32
    %cst_8 = arith.constant 6.000000e+00 : f32
    %9 = vector.broadcast %cst_7 : f32 to vector<16x256xf32>
    %10 = arith.maximumf %9, %8 : vector<16x256xf32>
    %11 = vector.broadcast %cst_8 : f32 to vector<16x256xf32>
    %12 = arith.minimumf %11, %10 : vector<16x256xf32>
    %13 = arith.mulf %6, %12 : vector<16x256xf32>
    %c0_9 = arith.constant 0 : index
    %c0_10 = arith.constant 0 : index
    %14 = vector.load %arg5[%c0_9, %c0_10] : memref<4x16xf32, #tpu.memory_space<vmem>>, vector<4x16xf32>
    %cst_11 = arith.constant dense<0.000000e+00> : vector<4x256xf32>
    %15 = tpu.matmul %14, %13, %cst_11 {dimension_numbers = #tpu.dot_dimension_numbers<[1], [0], [0], [1], [0, 0, 1, 1], [], []>} : vector<4x16xf32>, vector<16x256xf32>, vector<4x256xf32> -> vector<4x256xf32>
    %c0_12 = arith.constant 0 : index
    %c0_13 = arith.constant 0 : index
    %16 = vector.load %arg6[%c0_12, %c0_13] : memref<4x1xf32, #tpu.memory_space<vmem>>, vector<4x1xf32>
    %17 = vector.broadcast %16 : vector<4x1xf32> to vector<4x256xf32>
    %18 = arith.addf %15, %17 : vector<4x256xf32>
    %c0_14 = arith.constant 0 : index
    %c0_15 = arith.constant 0 : index
    %c0_16 = arith.constant 0 : index
    %19 = vector.load %arg7[%c0_14, %c0_15, %c0_16] : memref<1x4x256xf32, #tpu.memory_space<vmem>>, vector<1x4x256xf32>
    %20 = vector.shape_cast %19 : vector<1x4x256xf32> to vector<4x256xf32>
    %21 = vector.shape_cast %18 : vector<4x256xf32> to vector<1x4x256xf32>
    tpu.vector_store %arg7[%c0_14, %c0_15, %c0_16], %21 {strides = array<i32>} : memref<1x4x256xf32, #tpu.memory_space<vmem>>, vector<1x4x256xf32>,
    return
  }
  func.func @transform_0(%arg0: i32, %arg1: i32) -> (i32, i32, i32) {
    %c0_i32 = arith.constant 0 : i32
    %c0_i32_0 = arith.constant 0 : i32
    return %arg0, %c0_i32, %arg1 : i32, i32, i32
  }
  func.func @transform_1(%arg0: i32, %arg1: i32) -> (i32, i32) {
    %c0_i32 = arith.constant 0 : i32
    %c0_i32_0 = arith.constant 0 : i32
    %c0_i32_1 = arith.constant 0 : i32
    return %c0_i32, %c0_i32_0 : i32, i32
  }
  func.func @transform_2(%arg0: i32, %arg1: i32) -> (i32, i32) {
    %c0_i32 = arith.constant 0 : i32
    %c0_i32_0 = arith.constant 0 : i32
    %c0_i32_1 = arith.constant 0 : i32
    return %c0_i32, %c0_i32_0 : i32, i32
  }
  func.func @transform_3(%arg0: i32, %arg1: i32) -> (i32, i32) {
    %c0_i32 = arith.constant 0 : i32
    %c0_i32_0 = arith.constant 0 : i32
    %c0_i32_1 = arith.constant 0 : i32
    return %c0_i32, %c0_i32_0 : i32, i32
  }
  func.func @transform_4(%arg0: i32, %arg1: i32) -> (i32, i32) {
    %c0_i32 = arith.constant 0 : i32
    %c0_i32_0 = arith.constant 0 : i32
    %c0_i32_1 = arith.constant 0 : i32
    return %c0_i32, %c0_i32_0 : i32, i32
  }
  func.func @transform_5(%arg0: i32, %arg1: i32) -> (i32, i32, i32) {
    %c0_i32 = arith.constant 0 : i32
    %c0_i32_0 = arith.constant 0 : i32
    return %arg0, %c0_i32, %arg1 : i32, i32, i32
  }
}

</mosaic_0001>

<llo_original>
// kernel: feed_forward.1
$region0: #{feed_forward.1}
  #allocation0 [shape = 'u32[]', space=smem, size = 0x4, offset = 0x4, fixed_abs, tag = 'smem constant byte address 0x4 - core index']
  #allocation1 [shape = 'u32[144,128]{1,0:T(1,128)}', space=vmem, size = 0x12000, scoped, tag = 'internal scratch']
  %s0 = inlined_call_operand.vmem [shape: f32[2,4,256], index: 0, kind: input, shape index: {}]
  %s1 = inlined_call_operand.vmem [shape: f32[16,4], index: 1, kind: input, shape index: {}]
  %s2 = inlined_call_operand.vmem [shape: f32[16,1], index: 2, kind: input, shape index: {}]
  %s3 = inlined_call_operand.vmem [shape: f32[4,16], index: 3, kind: input, shape index: {}]
  %s4 = inlined_call_operand.vmem [shape: f32[4,1], index: 4, kind: input, shape index: {}]
  %s5 = inlined_call_operand.vmem [shape: f32[2,4,256], index: 5, kind: output, shape index: {}]
  %s6 = sld [smem:[#allocation0]]
  $region53: #{feed_forward.1} parent=0
    _
  %s8 = ssub.s32 1, %s6
  %s9 = scalar_select 0, %s8, %s6
  loop: start=0, step=1, limit=4
  $region2: #{feed_forward.1} parent=0 // loop_pre_header
    _
  $region3: #{feed_forward.1} parent=0 // loop_header
    %s11 = sphi 0, %s15
    %p12 = scmp.ge.s32.totalorder %s11, 4
    %s18 = sphi 0, %s30
    %s19 = sphi 0, %s26
    %s20 = sphi 0, %s18
    %s21 = sphi 0, %s19
    %s22 = sphi 0, %s20
    %s23 = sphi 0, %s21
    %s35 = sphi 0, %s37
    %s38 = sphi 0, %s35
    %s39 = sphi 0, %s38
    %s55 = sphi 0, %s39
    %s59 = sphi 0, %s59
    %s61 = sphi 0, %s59
    %s62 = sphi 0, %s61
    %s76 = sphi 0, %s62
    %s80 = sphi 0, %s80
    %s82 = sphi 0, %s80
    %s83 = sphi 0, %s82
    %s97 = sphi 0, %s83
    %s101 = sphi 0, %s101
    %s103 = sphi 0, %s101
    %s104 = sphi 0, %s103
    %s118 = sphi 0, %s104
    %s122 = sphi 0, %s122
    %s124 = sphi 0, %s122
    %s125 = sphi 0, %s124
    %s139 = sphi 0, %s125
    %s147 = sphi 0, %s149
    %s150 = sphi 0, %s147
    %s151 = sphi 0, %s150
    %s167 = sphi 0, %s151
  $region4: #{feed_forward.1} parent=0 // loop_header_branch
    %14 = sbr.rel (%p12) target = $region8
  $region5: #{feed_forward.1} parent=0 // loop_body
    %s16 = ssub.s32 %s11, 1
    %s17 = ssub.s32 %s11, 2
    %s24 = sadd.s32 1, %s19
    %p25 = scmp.ge.s32.totalorder %s24, 1
    %s26 = scalar_select %p25, 0, %s24
    %s27 = sadd.s32 1, %s18
    %s28 = scalar_select %p25, %s27, %s18
    %p29 = scmp.ge.s32.totalorder %s28, 2
    %s30 = scalar_select %p29, 0, %s28
    %s31 = ssub.s32 %s18, %s30
    %s32 = ssub.s32 %s19, %s26
    %s33 = sor.u32 %s31, %s32
    %p34 = scmp.eq.s32.totalorder %s33, 0
    %s36 = sadd.s32 %s35, 1
    %s37 = scalar_select %p34, %s35, %s36
    %p40 = pneg %p34
    %p41 = scmp.eq.s32.totalorder %s11, 1
    %p42 = por %p40, %p41
    %p43 = scmp.ne.s32.totalorder %s35, %s38
    %p44 = scmp.eq.s32.totalorder %s11, 0
    %p45 = por %p43, %p44
    %p46 = scmp.ne.s32.totalorder %s35, %s38
    %p47 = scmp.eq.s32.totalorder %s16, 1
    %p48 = por %p46, %p47
    %p49 = scmp.ne.s32.totalorder %s38, %s39
    %p50 = scmp.eq.s32.totalorder %s16, 0
    %p51 = por %p49, %p50
    %p52 = scmp.ne.s32.totalorder %s38, %s39
    %p53 = scmp.eq.s32.totalorder %s17, 1
    %p54 = por %p52, %p53
    %p56 = scmp.ne.s32.totalorder %s39, %s55
    %p57 = scmp.eq.s32.totalorder %s17, 0
    %p58 = por %p56, %p57
    %s60 = sadd.s32 %s59, 1
    %p63 = scmp.eq.s32.totalorder %s11, 1
    %p64 = scmp.ne.s32.totalorder %s59, %s61
    %p65 = scmp.eq.s32.totalorder %s11, 0
    %p66 = por %p64, %p65
    %p67 = scmp.ne.s32.totalorder %s59, %s61
    %p68 = scmp.eq.s32.totalorder %s16, 1
    %p69 = por %p67, %p68
    %p70 = scmp.ne.s32.totalorder %s61, %s62
    %p71 = scmp.eq.s32.totalorder %s16, 0
    %p72 = por %p70, %p71
    %p73 = scmp.ne.s32.totalorder %s61, %s62
    %p74 = scmp.eq.s32.totalorder %s17, 1
    %p75 = por %p73, %p74
    %p77 = scmp.ne.s32.totalorder %s62, %s76
    %p78 = scmp.eq.s32.totalorder %s17, 0
    %p79 = por %p77, %p78
    %s81 = sadd.s32 %s80, 1
    %p84 = scmp.eq.s32.totalorder %s11, 1
    %p85 = scmp.ne.s32.totalorder %s80, %s82
    %p86 = scmp.eq.s32.totalorder %s11, 0
    %p87 = por %p85, %p86
    %p88 = scmp.ne.s32.totalorder %s80, %s82
    %p89 = scmp.eq.s32.totalorder %s16, 1
    %p90 = por %p88, %p89
    %p91 = scmp.ne.s32.totalorder %s82, %s83
    %p92 = scmp.eq.s32.totalorder %s16, 0
    %p93 = por %p91, %p92
    %p94 = scmp.ne.s32.totalorder %s82, %s83
    %p95 = scmp.eq.s32.totalorder %s17, 1
    %p96 = por %p94, %p95
    %p98 = scmp.ne.s32.totalorder %s83, %s97
    %p99 = scmp.eq.s32.totalorder %s17, 0
    %p100 = por %p98, %p99
    %s102 = sadd.s32 %s101, 1
    %p105 = scmp.eq.s32.totalorder %s11, 1
    %p106 = scmp.ne.s32.totalorder %s101, %s103
    %p107 = scmp.eq.s32.totalorder %s11, 0
    %p108 = por %p106, %p107
    %p109 = scmp.ne.s32.totalorder %s101, %s103
    %p110 = scmp.eq.s32.totalorder %s16, 1
    %p111 = por %p109, %p110
    %p112 = scmp.ne.s32.totalorder %s103, %s104
    %p113 = scmp.eq.s32.totalorder %s16, 0
    %p114 = por %p112, %p113
    %p115 = scmp.ne.s32.totalorder %s103, %s104
    %p116 = scmp.eq.s32.totalorder %s17, 1
    %p117 = por %p115, %p116
    %p119 = scmp.ne.s32.totalorder %s104, %s118
    %p120 = scmp.eq.s32.totalorder %s17, 0
    %p121 = por %p119, %p120
    %s123 = sadd.s32 %s122, 1
    %p126 = scmp.eq.s32.totalorder %s11, 1
    %p127 = scmp.ne.s32.totalorder %s122, %s124
    %p128 = scmp.eq.s32.totalorder %s11, 0
    %p129 = por %p127, %p128
    %p130 = scmp.ne.s32.totalorder %s122, %s124
    %p131 = scmp.eq.s32.totalorder %s16, 1
    %p132 = por %p130, %p131
    %p133 = scmp.ne.s32.totalorder %s124, %s125
    %p134 = scmp.eq.s32.totalorder %s16, 0
    %p135 = por %p133, %p134
    %p136 = scmp.ne.s32.totalorder %s124, %s125
    %p137 = scmp.eq.s32.totalorder %s17, 1
    %p138 = por %p136, %p137
    %p140 = scmp.ne.s32.totalorder %s125, %s139
    %p141 = scmp.eq.s32.totalorder %s17, 0
    %p142 = por %p140, %p141
    %s143 = ssub.s32 %s18, %s30
    %s144 = ssub.s32 %s19, %s26
    %s145 = sor.u32 %s143, %s144
    %p146 = scmp.eq.s32.totalorder %s145, 0
    %s148 = sadd.s32 %s147, 1
    %s149 = scalar_select %p146, %s147, %s148
    %p152 = pneg %p146
    %p153 = scmp.eq.s32.totalorder %s11, 1
    %p154 = por %p152, %p153
    %p155 = scmp.ne.s32.totalorder %s147, %s150
    %p156 = scmp.eq.s32.totalorder %s11, 0
    %p157 = por %p155, %p156
    %p158 = scmp.ne.s32.totalorder %s147, %s150
    %p159 = scmp.eq.s32.totalorder %s16, 1
    %p160 = por %p158, %p159
    %p161 = scmp.ne.s32.totalorder %s150, %s151
    %p162 = scmp.eq.s32.totalorder %s16, 0
    %p163 = por %p161, %p162
    %p164 = scmp.ne.s32.totalorder %s150, %s151
    %p165 = scmp.eq.s32.totalorder %s17, 1
    %p166 = por %p164, %p165
    %p168 = scmp.ne.s32.totalorder %s151, %s167
    %p169 = scmp.eq.s32.totalorder %s17, 0
    %p170 = por %p168, %p169
    %p171 = scmp.le.s32.totalorder 1, %s11
    %p172 = scmp.lt.s32.totalorder %s11, 3
    %p173 = pnand %p171, %p172
    %p174 = pneg %p173
    // Predicated region
    $region9: #{feed_forward.1} parent=5 // pred_check
      _
    $region10: #{feed_forward.1} parent=5 // pred_check_branch
      %176 = sbr.rel (%p173) target = $region12
    $region11: #{feed_forward.1} parent=5 // pred_region
      %s177 = ssub.s32 %s11, 1
      // Predicated region
      $region13: #{feed_forward.1} parent=11 // pred_check
        %p178 = pneg %p72
      $region14: #{feed_forward.1} parent=11 // pred_check_branch
        %180 = sbr.rel (%p178) target = $region16
      $region15: #{feed_forward.1} parent=11 // pred_region
        _
      $region16: #{feed_forward.1} parent=11 // pred_fallthru
        _
      // Predicated region
      $region17: #{feed_forward.1} parent=11 // pred_check
        %p181 = pneg %p93
      $region18: #{feed_forward.1} parent=11 // pred_check_branch
        %183 = sbr.rel (%p181) target = $region20
      $region19: #{feed_forward.1} parent=11 // pred_region
        _
      $region20: #{feed_forward.1} parent=11 // pred_fallthru
        _
      // Predicated region
      $region21: #{feed_forward.1} parent=11 // pred_check
        %p184 = pneg %p114
      $region22: #{feed_forward.1} parent=11 // pred_check_branch
        %186 = sbr.rel (%p184) target = $region24
      $region23: #{feed_forward.1} parent=11 // pred_region
        _
      $region24: #{feed_forward.1} parent=11 // pred_fallthru
        _
      // Predicated region
      $region25: #{feed_forward.1} parent=11 // pred_check
        %p187 = pneg %p135
      $region26: #{feed_forward.1} parent=11 // pred_check_branch
        %189 = sbr.rel (%p187) target = $region28
      $region27: #{feed_forward.1} parent=11 // pred_region
        _
      $region28: #{feed_forward.1} parent=11 // pred_fallthru
        _
    $region12: #{feed_forward.1} parent=5 // pred_fallthru
      _
    %p190 = scmp.lt.s32.totalorder %s11, 2
    // Predicated region
    $region29: #{feed_forward.1} parent=5 // pred_check
      %p191 = pneg %p190
    $region30: #{feed_forward.1} parent=5 // pred_check_branch
      %193 = sbr.rel (%p191) target = $region32
    $region31: #{feed_forward.1} parent=5 // pred_region
      // Predicated region
      $region33: #{feed_forward.1} parent=31 // pred_check
        %p194 = pneg %p45
      $region34: #{feed_forward.1} parent=31 // pred_check_branch
        %196 = sbr.rel (%p194) target = $region36
      $region35: #{feed_forward.1} parent=31 // pred_region
        %s197 = smul.u32 2, %s19
        %p198 = scmp.lt.s32.totalorder %s18, 1
        %s199 = scalar_select %p198, %s18, 1
        %p200 = scmp.lt.s32.totalorder %s197, 1
        %s201 = scalar_select %p200, %s197, 1
        %s202 = smul.addr %s199, 2
        %s203 = sadd.s32 %s201, %s202
        %s204 = smul.addr %s203, 4
        %s205 = scalar_lea.vmem %s0, %s204
        %s206 = smul.u32 2, %s19
      $region36: #{feed_forward.1} parent=31 // pred_fallthru
        _
    $region32: #{feed_forward.1} parent=5 // pred_fallthru
      _
    %p207 = scmp.le.s32.totalorder 1, %s11
    %p208 = scmp.lt.s32.totalorder %s11, 3
    %p209 = pnand %p207, %p208
    %p210 = pneg %p209
    // Predicated region
    $region37: #{feed_forward.1} parent=5 // pred_check
      _
    $region38: #{feed_forward.1} parent=5 // pred_check_branch
      %212 = sbr.rel (%p209) target = $region40
    $region39: #{feed_forward.1} parent=5 // pred_region
      %s213 = ssub.s32 %s11, 1
      %s214 = smul.u32 2, %s21
      %p215 = scmp.lt.s32.totalorder %s20, 1
      %s216 = scalar_select %p215, %s20, 1
      %p217 = scmp.lt.s32.totalorder %s214, 1
      %s218 = scalar_select %p217, %s214, 1
      %s219 = smul.addr %s216, 2
      %s220 = sadd.s32 %s218, %s219
      %s221 = smul.addr %s220, 4
      %s222 = scalar_lea.vmem %s0, %s221
      %p223 = pneg %p51
      %p224 = pneg %p48
      %p225 = pneg %p72
      %p226 = pneg %p69
      %p227 = pneg %p93
      %p228 = pneg %p90
      %p229 = pneg %p114
      %p230 = pneg %p111
      %p231 = pneg %p135
      %p232 = pneg %p132
      %p233 = pneg %p163
      %p234 = pneg %p160
      %s235 = smul.u32 2, %s21
      %p236 = scmp.lt.s32.totalorder %s20, 1
      %s237 = scalar_select %p236, %s20, 1
      %p238 = scmp.lt.s32.totalorder %s235, 1
      %s239 = scalar_select %p238, %s235, 1
      %s240 = smul.addr %s237, 2
      %s241 = sadd.s32 %s239, %s240
      %s242 = smul.addr %s241, 4
      %s243 = scalar_lea.vmem %s5, %s242
      %s244 = smul.u32 2, %s21
      %p245 = scmp.lt.s32.totalorder %s20, 1
      %s246 = scalar_select %p245, %s20, 1
      %p247 = scmp.lt.s32.totalorder %s244, 1
      %s248 = scalar_select %p247, %s244, 1
      %s249 = smul.addr %s246, 2
      %s250 = sadd.s32 %s248, %s249
      %s251 = smul.addr %s250, 4
      %s252 = scalar_lea.vmem %s0, %s251
      %s253 = smul.u32 2, %s21
      %s254 = smul.u32 2, %s21
      %p255 = scmp.lt.s32.totalorder %s20, 1
      %s256 = scalar_select %p255, %s20, 1
      %p257 = scmp.lt.s32.totalorder %s254, 1
      %s258 = scalar_select %p257, %s254, 1
      %s259 = smul.addr %s256, 2
      %s260 = sadd.s32 %s258, %s259
      %s261 = smul.addr %s260, 4
      %s262 = scalar_lea.vmem %s5, %s261
      %s263 = smul.u32 2, %s21
      %v264 = vld [vmem:[%s252] sm:$0xff]
      %v265 = vld [vmem:[%s1] sm:$0xff]
      %v266 = vld [vmem:[%s1 + $0x8] sm:$0xff]
      %v267 = vld [vmem:[%s2] sm:$0xff]
      %v268 = vld [vmem:[%s2 + $0x8] sm:$0xff]
      %270 = vset.pattern.permute.xlu0 0
      %271 = vperm.xlu0 %270, %v267
      %v272 = vpop.permute.xlu0 %271
      %275 = vset.pattern.permute.xlu0 0
      %276 = vperm.xlu0 %275, %v268
      %v277 = vpop.permute.xlu0 %276
      %v280 = vcombine.high %v264, %v264
      %vm281 = vcmask 31744
      %v283 = vsel %vm281, %v265, 0
      %v286 = vsel %vm281, %v266, 0
      %vm288 = vcmask 1043456
      %v289 = vsel %vm288, %v264, 0
      %v291 = vsel %vm288, %v280, 0
      %293 = vmatprep.subr.mxu0 %v291
      %294 = vmatpush1.msra.mxu0 %v289
      %295 = vmatprep.subr.mxu0 0.0
      %296 = vmatpush1.msra.mxu0 0.0
      %297 = vmatprep.subr.mxu0 0.0
      %298 = vmatpush1.msra.mxu0 0.0
      %299 = vmatprep.subr.mxu0 0.0
      %300 = vmatpush1.msra.mxu0 0.0
      %301 = vmatprep.subr.mxu0 0.0
      %302 = vmatpush1.msra.mxu0 0.0
      %303 = vmatprep.subr.mxu0 0.0
      %304 = vmatpush1.msra.mxu0 0.0
      %305 = vmatprep.subr.mxu0 0.0
      %306 = vmatpush1.msra.mxu0 0.0
      %307 = vmatprep.subr.mxu0 0.0
      %308 = vmatpush1.msra.mxu0 0.0
      %309 = vmatprep.subr.mxu0 0.0
      %310 = vmatpush1.msra.mxu0 0.0
      %311 = vmatprep.subr.mxu0 0.0
      %312 = vmatpush1.msra.mxu0 0.0
      %313 = vmatprep.subr.mxu0 0.0
      %314 = vmatpush1.msra.mxu0 0.0
      %315 = vmatprep.subr.mxu0 0.0
      %316 = vmatpush1.msra.mxu0 0.0
      %317 = vmatprep.subr.mxu0 0.0
      %318 = vmatpush1.msra.mxu0 0.0
      %319 = vmatprep.subr.mxu0 0.0
      %320 = vmatpush1.msra.mxu0 0.0
      %321 = vmatprep.subr.mxu0 0.0
      %322 = vmatpush1.msra.mxu0 0.0
      %323 = vmatprep.subr.mxu0 0.0
      %324 = vmatpush1.msra.mxu0 0.0
      %325 = vmatprep.subr.mxu0 0.0
      %326 = vmatpush1.msra.mxu0 0.0
      %327 = vmatprep.subr.mxu0 0.0
      %328 = vmatpush1.msra.mxu0 0.0
      %329 = vmatprep.subr.mxu0 0.0
      %330 = vmatpush1.msra.mxu0 0.0
      %331 = vmatprep.subr.mxu0 0.0
      %332 = vmatpush1.msra.mxu0 0.0
      %333 = vmatprep.subr.mxu0 0.0
      %334 = vmatpush1.msra.mxu0 0.0
      %335 = vmatprep.subr.mxu0 0.0
      %336 = vmatpush1.msra.mxu0 0.0
      %337 = vmatprep.subr.mxu0 0.0
      %338 = vmatpush1.msra.mxu0 0.0
      %339 = vmatprep.subr.mxu0 0.0
      %340 = vmatpush1.msra.mxu0 0.0
      %341 = vmatprep.subr.mxu0 0.0
      %342 = vmatpush1.msra.mxu0 0.0
      %343 = vmatprep.subr.mxu0 0.0
      %344 = vmatpush1.msra.mxu0 0.0
      %345 = vmatprep.subr.mxu0 0.0
      %346 = vmatpush1.msra.mxu0 0.0
      %347 = vmatprep.subr.mxu0 0.0
      %348 = vmatpush1.msra.mxu0 0.0
      %349 = vmatprep.subr.mxu0 0.0
      %350 = vmatpush1.msra.mxu0 0.0
      %351 = vmatprep.subr.mxu0 0.0
      %352 = vmatpush1.msra.mxu0 0.0
      %353 = vmatprep.subr.mxu0 0.0
      %354 = vmatpush1.msra.mxu0 0.0
      %355 = vmatprep.subr.mxu0 0.0
      %356 = vmatpush1.msra.mxu0 0.0
      %357 = vmatprep.mubr.f32.mxu0 0.0
      %358 = vmatmul.mubr.f32.gmra.mrb[0].mxu0 %v283
      %v359 = vpop.f32.mrb[0].mxu0
      %v360 = vadd.f32 %v272, %v359
      %v361 = vpop.f32.mrb[0].mxu0
      %v362 = vadd.f32 %v272, %v361
      %363 = vmatprep.mubr.f32.mxu0 0.0
      %364 = vmatmul.mubr.f32.gmra.mrb[0].mxu0 %v286
      %v365 = vpop.f32.mrb[0].mxu0
      %v366 = vadd.f32 %v277, %v365
      %v367 = vpop.f32.mrb[0].mxu0
      %v368 = vadd.f32 %v277, %v367
      %369 = vdwg.mxu0
      %v370 = vadd.f32 %v360, 3.0
      %v371 = vadd.f32 %v362, 3.0
      %v372 = vadd.f32 %v366, 3.0
      %v373 = vadd.f32 %v368, 3.0
      %v374 = vmax.f32 %v370, 0.0
      %v375 = vmax.f32 %v371, 0.0
      %v376 = vmax.f32 %v372, 0.0
      %v377 = vmax.f32 %v373, 0.0
      %v378 = vmin.f32 %v374, 6.0
      %v379 = vmin.f32 %v375, 6.0
      %v380 = vmin.f32 %v376, 6.0
      %v381 = vmin.f32 %v377, 6.0
      %v382 = vmul.f32 %v360, %v378
      %v383 = vmul.f32 %v362, %v379
      %v384 = vmul.f32 %v366, %v380
      %v385 = vmul.f32 %v368, %v381
      %v386 = vld [vmem:[%s3] sm:$0xf]
      %v387 = vld [vmem:[%s4] sm:$0xf]
      %389 = vset.pattern.permute.xlu0 0
      %390 = vperm.xlu0 %389, %v387
      %v391 = vpop.permute.xlu0 %390
      %vm393 = vcmask 130048
      %v395 = vsel %vm393, %v386, 0
      %397 = vmatprep.subr.mxu0 %v383
      %398 = vmatpush1.msra.mxu0 %v382
      %399 = vmatprep.subr.mxu0 %v385
      %400 = vmatpush1.msra.mxu0 %v384
      %401 = vmatprep.subr.mxu0 0.0
      %402 = vmatpush1.msra.mxu0 0.0
      %403 = vmatprep.subr.mxu0 0.0
      %404 = vmatpush1.msra.mxu0 0.0
      %405 = vmatprep.subr.mxu0 0.0
      %406 = vmatpush1.msra.mxu0 0.0
      %407 = vmatprep.subr.mxu0 0.0
      %408 = vmatpush1.msra.mxu0 0.0
      %409 = vmatprep.subr.mxu0 0.0
      %410 = vmatpush1.msra.mxu0 0.0
      %411 = vmatprep.subr.mxu0 0.0
      %412 = vmatpush1.msra.mxu0 0.0
      %413 = vmatprep.subr.mxu0 0.0
      %414 = vmatpush1.msra.mxu0 0.0
      %415 = vmatprep.subr.mxu0 0.0
      %416 = vmatpush1.msra.mxu0 0.0
      %417 = vmatprep.subr.mxu0 0.0
      %418 = vmatpush1.msra.mxu0 0.0
      %419 = vmatprep.subr.mxu0 0.0
      %420 = vmatpush1.msra.mxu0 0.0
      %421 = vmatprep.subr.mxu0 0.0
      %422 = vmatpush1.msra.mxu0 0.0
      %423 = vmatprep.subr.mxu0 0.0
      %424 = vmatpush1.msra.mxu0 0.0
      %425 = vmatprep.subr.mxu0 0.0
      %426 = vmatpush1.msra.mxu0 0.0
      %427 = vmatprep.subr.mxu0 0.0
      %428 = vmatpush1.msra.mxu0 0.0
      %429 = vmatprep.subr.mxu0 0.0
      %430 = vmatpush1.msra.mxu0 0.0
      %431 = vmatprep.subr.mxu0 0.0
      %432 = vmatpush1.msra.mxu0 0.0
      %433 = vmatprep.subr.mxu0 0.0
      %434 = vmatpush1.msra.mxu0 0.0
      %435 = vmatprep.subr.mxu0 0.0
      %436 = vmatpush1.msra.mxu0 0.0
      %437 = vmatprep.subr.mxu0 0.0
      %438 = vmatpush1.msra.mxu0 0.0
      %439 = vmatprep.subr.mxu0 0.0
      %440 = vmatpush1.msra.mxu0 0.0
      %441 = vmatprep.subr.mxu0 0.0
      %442 = vmatpush1.msra.mxu0 0.0
      %443 = vmatprep.subr.mxu0 0.0
      %444 = vmatpush1.msra.mxu0 0.0
      %445 = vmatprep.subr.mxu0 0.0
      %446 = vmatpush1.msra.mxu0 0.0
      %447 = vmatprep.subr.mxu0 0.0
      %448 = vmatpush1.msra.mxu0 0.0
      %449 = vmatprep.subr.mxu0 0.0
      %450 = vmatpush1.msra.mxu0 0.0
      %451 = vmatprep.subr.mxu0 0.0
      %452 = vmatpush1.msra.mxu0 0.0
      %453 = vmatprep.subr.mxu0 0.0
      %454 = vmatpush1.msra.mxu0 0.0
      %455 = vmatprep.subr.mxu0 0.0
      %456 = vmatpush1.msra.mxu0 0.0
      %457 = vmatprep.subr.mxu0 0.0
      %458 = vmatpush1.msra.mxu0 0.0
      %459 = vmatprep.subr.mxu0 0.0
      %460 = vmatpush1.msra.mxu0 0.0
      %461 = vmatprep.mubr.f32.mxu0 0.0
      %462 = vmatmul.mubr.f32.gmra.mrb[0].mxu0 %v395
      %v463 = vpop.f32.mrb[0].mxu0
      %v464 = vadd.f32 %v391, %v463
      %v465 = vpop.f32.mrb[0].mxu0
      %v466 = vadd.f32 %v391, %v465
      %467 = vdwg.mxu0
      %v470 = vcombine.low %v464, %v466
      %472 = vst [vmem:[%s262] sm:$0xff] %v470
      %s473 = smul.u32 2, %s21
      %p474 = scmp.lt.s32.totalorder %s20, 1
      %s475 = scalar_select %p474, %s20, 1
      %p476 = scmp.lt.s32.totalorder %s473, 1
      %s477 = scalar_select %p476, %s473, 1
      %s478 = smul.addr %s475, 2
      %s479 = sadd.s32 %s477, %s478
      %s480 = smul.addr %s479, 4
      %s481 = scalar_lea.vmem %s5, %s480
      // Predicated region
      $region41: #{feed_forward.1} parent=39 // pred_check
        %p482 = pneg %p160
      $region42: #{feed_forward.1} parent=39 // pred_check_branch
        %484 = sbr.rel (%p482) target = $region44
      $region43: #{feed_forward.1} parent=39 // pred_region
        %s485 = smul.u32 2, %s21
      $region44: #{feed_forward.1} parent=39 // pred_fallthru
        _
    $region40: #{feed_forward.1} parent=5 // pred_fallthru
      _
    %p486 = scmp.le.s32.totalorder 2, %s11
    // Predicated region
    $region45: #{feed_forward.1} parent=5 // pred_check
      %p487 = pneg %p486
    $region46: #{feed_forward.1} parent=5 // pred_check_branch
      %489 = sbr.rel (%p487) target = $region48
    $region47: #{feed_forward.1} parent=5 // pred_region
      %s490 = ssub.s32 %s11, 2
      // Predicated region
      $region49: #{feed_forward.1} parent=47 // pred_check
        %p491 = pneg %p166
      $region50: #{feed_forward.1} parent=47 // pred_check_branch
        %493 = sbr.rel (%p491) target = $region52
      $region51: #{feed_forward.1} parent=47 // pred_region
        %s494 = smul.u32 2, %s23
        %p495 = scmp.lt.s32.totalorder %s22, 1
        %s496 = scalar_select %p495, %s22, 1
        %p497 = scmp.lt.s32.totalorder %s494, 1
        %s498 = scalar_select %p497, %s494, 1
        %s499 = smul.addr %s496, 2
        %s500 = sadd.s32 %s498, %s499
        %s501 = smul.addr %s500, 4
        %s502 = scalar_lea.vmem %s5, %s501
      $region52: #{feed_forward.1} parent=47 // pred_fallthru
        _
    $region48: #{feed_forward.1} parent=5 // pred_fallthru
      _
  $region6: #{feed_forward.1} parent=0 // loop_footer
    %s15 = sadd.s32 1, %s11
  $region7: #{feed_forward.1} parent=0 // loop_footer_branch
    %10 = sbr.rel target = $region3
  $region8: #{feed_forward.1} parent=0 // loop_exit
    _

</llo_original>
